<compile_context>
chip_gen: v7x
topology: tpu7x:2x2x1
jax: 0.10.0
libtpu: 0.0.40
codegen_flags: <defaults>
</compile_context>

<pallas_src>
import functools

import jax
import jax.numpy as jnp
from jax.experimental import pallas as pl
from jax.experimental.pallas import tpu as pltpu

K = 4              # ConvTranspose2d kernel size
PAD = 1            # equivalent direct-conv padding: K - 1 - torch_padding = 4 - 1 - 2
MIN_VALUE = 1.3862944
MAX_VALUE = 1.4142135


def _convt_clamp_kernel(x_ref, w_ref, b_ref, o_ref, *, wp):
    """One batch element.

    x_ref : (1, Lp)       f32 VMEM  zero-padded input, flattened row-major
                                    (row stride == wp)
    w_ref : (C_out, K*K)  f32 VMEM  spatially flipped weights, t = a*K + b
    b_ref : (C_out, 1)    f32 VMEM  bias
    o_ref : (C_out, M)    f32 VMEM  M = Ho*wp flattened output rows; the
                                    wp - Wo overhang columns per row are
                                    garbage and dropped by the wrapper.
    """
    c_out, m = o_ref.shape

    # im2col: both the flattened padded input and the flattened output use row
    # stride wp, so tap (a, b) is one contiguous slice of the flat input.
    taps = [x_ref[:, a * wp + b: a * wp + b + m]
            for a in range(K) for b in range(K)]
    cols = jnp.concatenate(taps, axis=0)                      # (K*K, M)

    # One small MXU matmul computes all 8 output channels at once.
    acc = jnp.dot(w_ref[...], cols,
                  preferred_element_type=jnp.float32,
                  precision=jax.lax.Precision.HIGHEST)        # (C_out, M)

    # clamp_min then clamp_max (MIN < MAX so clip is equivalent); single
    # lane-dense store of the whole slab.
    o_ref[...] = jnp.clip(acc + b_ref[...], MIN_VALUE, MAX_VALUE)


def conv_transpose_clamp(x, weight, bias):
    """x: (N, 1, H, W); weight: (1, C_out, K, K) (PyTorch ConvTranspose2d
    layout); bias: (C_out,).  Returns (N, C_out, H-1, W-1)."""
    n, cin, h, w = x.shape
    assert cin == 1 and weight.shape[0] == 1 and weight.shape[2:] == (K, K)
    c_out = weight.shape[1]
    ho, wo = h - 1, w - 1                 # (H-1)*1 - 2*2 + 4 + 0
    wp = w + 2 * PAD                      # padded row width (flat row stride)
    m = ho * wp                           # flattened output block length
    lp = (h + 2 * PAD + 1) * wp           # one extra zero row absorbs the
                                          # overhang of the last im2col slices

    # Flip kernel for the equivalent direct convolution, flatten taps:
    # w_mat[o, a*K + b] = weight[0, o, K-1-a, K-1-b]
    w_mat = weight[0, :, ::-1, ::-1].reshape(c_out, K * K).astype(jnp.float32)
    b_col = bias.reshape(c_out, 1).astype(jnp.float32)

    # Zero pad (1 top, 2 bottom, 1 left/right) and flatten the rows.
    xp = jnp.pad(x[:, 0].astype(jnp.float32),
                 ((0, 0), (PAD, PAD + 1), (PAD, PAD)))        # (N, H+3, W+2)
    xp_flat = xp.reshape(n, 1, lp)        # free metadata reshape on HBM

    out_flat = pl.pallas_call(
        functools.partial(_convt_clamp_kernel, wp=wp),
        out_shape=jax.ShapeDtypeStruct((n, c_out, m), jnp.float32),
        grid=(n,),
        in_specs=[
            pl.BlockSpec((None, 1, lp), lambda i: (i, 0, 0)),   # per-batch input
            pl.BlockSpec((c_out, K * K), lambda i: (0, 0)),     # weights (invariant)
            pl.BlockSpec((c_out, 1), lambda i: (0, 0)),         # bias (invariant)
        ],
        out_specs=pl.BlockSpec((None, c_out, m), lambda i: (i, 0, 0)),
        compiler_params=pltpu.CompilerParams(
            dimension_semantics=("parallel",)),
    )(xp_flat, w_mat, b_col)

    # (N, C_out, Ho*Wp) -> (N, C_out, Ho, Wp); drop the Wp-Wo overhang columns.
    return out_flat.reshape(n, c_out, ho, wp)[..., :wo]


def reference(x, weight, bias):
    """Pure-JAX reference for ConvTranspose2d(stride=1, pad=2) + clamp."""
    c_out = weight.shape[1]
    wf = weight[0, :, ::-1, ::-1]                          # (C_out, K, K)
    x_pad = jnp.pad(x[:, 0], ((0, 0), (PAD, PAD), (PAD, PAD)))
    n, hp, wpad = x_pad.shape
    ho, wo = hp - K + 1, wpad - K + 1
    out = jnp.zeros((n, c_out, ho, wo), jnp.float32) + bias[None, :, None, None]
    for a in range(K):
        for b in range(K):
            out = out + x_pad[:, None, a:a + ho, b:b + wo] * wf[None, :, a, b, None, None]
    return jnp.clip(out, MIN_VALUE, MAX_VALUE)


if __name__ == "__main__":
    key = jax.random.PRNGKey(0)
    kx, kw, kb, kx2 = jax.random.split(key, 4)

    C_OUT = 8
    # PyTorch ConvTranspose2d weight layout: (in_channels, out_channels, kH, kW)
    weight = jax.random.normal(kw, (1, C_OUT, K, K), jnp.float32) * 0.25
    bias = jax.random.normal(kb, (C_OUT,), jnp.float32) * 0.1

    run = jax.jit(conv_transpose_clamp)

    ok = True
    # batch=2 exercises the parallel batch grid; (1,1,64,64) matches the spec.
    for shape, kk in (((2, 1, 16, 16), kx), ((1, 1, 64, 64), kx2)):
        x = jax.random.normal(kk, shape, jnp.float32)
        out = jax.block_until_ready(run(x, weight, bias))
        ref = reference(x, weight, bias)
        nn, _, h, w = shape
        assert out.shape == (nn, C_OUT, h - 1, w - 1), out.shape
        # tolerance allows for MXU pass-reduction of the f32 matmul; any
        # tap/index/flip bug shows up as ~0.028 (clamp-band) mismatches.
        if not jnp.allclose(out, ref, atol=5e-3, rtol=5e-3):
            ok = False
    if not ok:
        raise SystemExit("kernel/reference mismatch")
    print("KERNEL_OK")
</pallas_src>

<mosaic_0001>
module attributes {stable_mosaic.version = 11 : i64} {
  func.func @_convt_clamp_kernel(%arg0: i32, %arg1: memref<1x1x342xf32, #tpu.memory_space<vmem>>, %arg2: memref<8x16xf32, #tpu.memory_space<vmem>>, %arg3: memref<8x1xf32, #tpu.memory_space<vmem>>, %arg4: memref<1x8x270xf32, #tpu.memory_space<vmem>>) attributes {dimension_semantics = [#tpu.dimension_semantics<parallel>], iteration_bounds = array<i64: 2>, scalar_prefetch = 0 : i64, scratch_operands = 0 : i64, tpu.core_type = #tpu.core_type<tc>, window_params = [{transform_indices = @transform_0, window_bounds = array<i64: 1, 1, 342>}, {pipeline_mode = #tpu.pipeline_mode<synchronous>, transform_indices = @transform_1, window_bounds = array<i64: 8, 16>}, {pipeline_mode = #tpu.pipeline_mode<synchronous>, transform_indices = @transform_2, window_bounds = array<i64: 8, 1>}, {transform_indices = @transform_3, window_bounds = array<i64: 1, 8, 270>}]} {
    %c0 = arith.constant 0 : index
    %c0_0 = arith.constant 0 : index
    %c0_1 = arith.constant 0 : index
    %0 = vector.load %arg1[%c0, %c0_0, %c0_1] : memref<1x1x342xf32, #tpu.memory_space<vmem>>, vector<1x1x270xf32>
    %1 = vector.shape_cast %0 : vector<1x1x270xf32> to vector<1x270xf32>
    %c0_2 = arith.constant 0 : index
    %c0_3 = arith.constant 0 : index
    %c1 = arith.constant 1 : index
    %2 = vector.load %arg1[%c0_2, %c0_3, %c1] : memref<1x1x342xf32, #tpu.memory_space<vmem>>, vector<1x1x270xf32>
    %3 = vector.shape_cast %2 : vector<1x1x270xf32> to vector<1x270xf32>
    %c0_4 = arith.constant 0 : index
    %c0_5 = arith.constant 0 : index
    %c2 = arith.constant 2 : index
    %4 = vector.load %arg1[%c0_4, %c0_5, %c2] : memref<1x1x342xf32, #tpu.memory_space<vmem>>, vector<1x1x270xf32>
    %5 = vector.shape_cast %4 : vector<1x1x270xf32> to vector<1x270xf32>
    %c0_6 = arith.constant 0 : index
    %c0_7 = arith.constant 0 : index
    %c3 = arith.constant 3 : index
    %6 = vector.load %arg1[%c0_6, %c0_7, %c3] : memref<1x1x342xf32, #tpu.memory_space<vmem>>, vector<1x1x270xf32>
    %7 = vector.shape_cast %6 : vector<1x1x270xf32> to vector<1x270xf32>
    %c0_8 = arith.constant 0 : index
    %c0_9 = arith.constant 0 : index
    %c18 = arith.constant 18 : index
    %8 = vector.load %arg1[%c0_8, %c0_9, %c18] : memref<1x1x342xf32, #tpu.memory_space<vmem>>, vector<1x1x270xf32>
    %9 = vector.shape_cast %8 : vector<1x1x270xf32> to vector<1x270xf32>
    %c0_10 = arith.constant 0 : index
    %c0_11 = arith.constant 0 : index
    %c19 = arith.constant 19 : index
    %10 = vector.load %arg1[%c0_10, %c0_11, %c19] : memref<1x1x342xf32, #tpu.memory_space<vmem>>, vector<1x1x270xf32>
    %11 = vector.shape_cast %10 : vector<1x1x270xf32> to vector<1x270xf32>
    %c0_12 = arith.constant 0 : index
    %c0_13 = arith.constant 0 : index
    %c20 = arith.constant 20 : index
    %12 = vector.load %arg1[%c0_12, %c0_13, %c20] : memref<1x1x342xf32, #tpu.memory_space<vmem>>, vector<1x1x270xf32>
    %13 = vector.shape_cast %12 : vector<1x1x270xf32> to vector<1x270xf32>
    %c0_14 = arith.constant 0 : index
    %c0_15 = arith.constant 0 : index
    %c21 = arith.constant 21 : index
    %14 = vector.load %arg1[%c0_14, %c0_15, %c21] : memref<1x1x342xf32, #tpu.memory_space<vmem>>, vector<1x1x270xf32>
    %15 = vector.shape_cast %14 : vector<1x1x270xf32> to vector<1x270xf32>
    %c0_16 = arith.constant 0 : index
    %c0_17 = arith.constant 0 : index
    %c36 = arith.constant 36 : index
    %16 = vector.load %arg1[%c0_16, %c0_17, %c36] : memref<1x1x342xf32, #tpu.memory_space<vmem>>, vector<1x1x270xf32>
    %17 = vector.shape_cast %16 : vector<1x1x270xf32> to vector<1x270xf32>
    %c0_18 = arith.constant 0 : index
    %c0_19 = arith.constant 0 : index
    %c37 = arith.constant 37 : index
    %18 = vector.load %arg1[%c0_18, %c0_19, %c37] : memref<1x1x342xf32, #tpu.memory_space<vmem>>, vector<1x1x270xf32>
    %19 = vector.shape_cast %18 : vector<1x1x270xf32> to vector<1x270xf32>
    %c0_20 = arith.constant 0 : index
    %c0_21 = arith.constant 0 : index
    %c38 = arith.constant 38 : index
    %20 = vector.load %arg1[%c0_20, %c0_21, %c38] : memref<1x1x342xf32, #tpu.memory_space<vmem>>, vector<1x1x270xf32>
    %21 = vector.shape_cast %20 : vector<1x1x270xf32> to vector<1x270xf32>
    %c0_22 = arith.constant 0 : index
    %c0_23 = arith.constant 0 : index
    %c39 = arith.constant 39 : index
    %22 = vector.load %arg1[%c0_22, %c0_23, %c39] : memref<1x1x342xf32, #tpu.memory_space<vmem>>, vector<1x1x270xf32>
    %23 = vector.shape_cast %22 : vector<1x1x270xf32> to vector<1x270xf32>
    %c0_24 = arith.constant 0 : index
    %c0_25 = arith.constant 0 : index
    %c54 = arith.constant 54 : index
    %24 = vector.load %arg1[%c0_24, %c0_25, %c54] : memref<1x1x342xf32, #tpu.memory_space<vmem>>, vector<1x1x270xf32>
    %25 = vector.shape_cast %24 : vector<1x1x270xf32> to vector<1x270xf32>
    %c0_26 = arith.constant 0 : index
    %c0_27 = arith.constant 0 : index
    %c55 = arith.constant 55 : index
    %26 = vector.load %arg1[%c0_26, %c0_27, %c55] : memref<1x1x342xf32, #tpu.memory_space<vmem>>, vector<1x1x270xf32>
    %27 = vector.shape_cast %26 : vector<1x1x270xf32> to vector<1x270xf32>
    %c0_28 = arith.constant 0 : index
    %c0_29 = arith.constant 0 : index
    %c56 = arith.constant 56 : index
    %28 = vector.load %arg1[%c0_28, %c0_29, %c56] : memref<1x1x342xf32, #tpu.memory_space<vmem>>, vector<1x1x270xf32>
    %29 = vector.shape_cast %28 : vector<1x1x270xf32> to vector<1x270xf32>
    %c0_30 = arith.constant 0 : index
    %c0_31 = arith.constant 0 : index
    %c57 = arith.constant 57 : index
    %30 = vector.load %arg1[%c0_30, %c0_31, %c57] : memref<1x1x342xf32, #tpu.memory_space<vmem>>, vector<1x1x270xf32>
    %31 = vector.shape_cast %30 : vector<1x1x270xf32> to vector<1x270xf32>
    %32 = tpu.concatenate %1, %3, %5, %7, %9, %11, %13, %15, %17, %19, %21, %23, %25, %27, %29, %31 in 0 : vector<1x270xf32>, vector<1x270xf32>, vector<1x270xf32>, vector<1x270xf32>, vector<1x270xf32>, vector<1x270xf32>, vector<1x270xf32>, vector<1x270xf32>, vector<1x270xf32>, vector<1x270xf32>, vector<1x270xf32>, vector<1x270xf32>, vector<1x270xf32>, vector<1x270xf32>, vector<1x270xf32>, vector<1x270xf32> -> vector<16x270xf32>
    %c0_32 = arith.constant 0 : index
    %c0_33 = arith.constant 0 : index
    %33 = vector.load %arg2[%c0_32, %c0_33] : memref<8x16xf32, #tpu.memory_space<vmem>>, vector<8x16xf32>
    %cst = arith.constant dense<0.000000e+00> : vector<8x270xf32>
    %34 = tpu.matmul %33, %32, %cst {dimension_numbers = #tpu.dot_dimension_numbers<[1], [0], [0], [1], [0, 0, 1, 1], [], []>, precision = #tpu.contract_precision<fp32>} : vector<8x16xf32>, vector<16x270xf32>, vector<8x270xf32> -> vector<8x270xf32>
    %c0_34 = arith.constant 0 : index
    %c0_35 = arith.constant 0 : index
    %35 = vector.load %arg3[%c0_34, %c0_35] : memref<8x1xf32, #tpu.memory_space<vmem>>, vector<8x1xf32>
    %36 = vector.broadcast %35 : vector<8x1xf32> to vector<8x270xf32>
    %37 = arith.addf %34, %36 : vector<8x270xf32>
    %cst_36 = arith.constant 1.38629436 : f32
    %cst_37 = arith.constant 1.41421354 : f32
    %38 = vector.broadcast %cst_36 : f32 to vector<8x270xf32>
    %39 = arith.maximumf %38, %37 : vector<8x270xf32>
    %40 = vector.broadcast %cst_37 : f32 to vector<8x270xf32>
    %41 = arith.minimumf %40, %39 : vector<8x270xf32>
    %c0_38 = arith.constant 0 : index
    %c0_39 = arith.constant 0 : index
    %c0_40 = arith.constant 0 : index
    %42 = vector.load %arg4[%c0_38, %c0_39, %c0_40] : memref<1x8x270xf32, #tpu.memory_space<vmem>>, vector<1x8x270xf32>
    %43 = vector.shape_cast %42 : vector<1x8x270xf32> to vector<8x270xf32>
    %44 = vector.shape_cast %41 : vector<8x270xf32> to vector<1x8x270xf32>
    tpu.vector_store %arg4[%c0_38, %c0_39, %c0_40], %44 {strides = array<i32>} : memref<1x8x270xf32, #tpu.memory_space<vmem>>, vector<1x8x270xf32>,
    return
  }
  func.func @transform_0(%arg0: i32) -> (i32, i32, i32) {
    %c0_i32 = arith.constant 0 : i32
    %c0_i32_0 = arith.constant 0 : i32
    %c0_i32_1 = arith.constant 0 : i32
    return %arg0, %c0_i32, %c0_i32_0 : i32, i32, i32
  }
  func.func @transform_1(%arg0: i32) -> (i32, i32) {
    %c0_i32 = arith.constant 0 : i32
    %c0_i32_0 = arith.constant 0 : i32
    %c0_i32_1 = arith.constant 0 : i32
    return %c0_i32, %c0_i32_0 : i32, i32
  }
  func.func @transform_2(%arg0: i32) -> (i32, i32) {
    %c0_i32 = arith.constant 0 : i32
    %c0_i32_0 = arith.constant 0 : i32
    %c0_i32_1 = arith.constant 0 : i32
    return %c0_i32, %c0_i32_0 : i32, i32
  }
  func.func @transform_3(%arg0: i32) -> (i32, i32, i32) {
    %c0_i32 = arith.constant 0 : i32
    %c0_i32_0 = arith.constant 0 : i32
    %c0_i32_1 = arith.constant 0 : i32
    return %arg0, %c0_i32, %c0_i32_0 : i32, i32, i32
  }
}

</mosaic_0001>

<llo_original>
// kernel: conv_transpose_clamp.1
$region0: #{conv_transpose_clamp.1}
  #allocation0 [shape = 'u32[]', space=smem, size = 0x4, offset = 0x4, fixed_abs, tag = 'smem constant byte address 0x4 - core index']
  #allocation1 [shape = 'u32[144,128]{1,0:T(1,128)}', space=vmem, size = 0x12000, scoped, tag = 'internal scratch']
  %s0 = inlined_call_operand.vmem [shape: f32[2,1,342], index: 0, kind: input, shape index: {}]
  %s1 = inlined_call_operand.vmem [shape: f32[8,16], index: 1, kind: input, shape index: {}]
  %s2 = inlined_call_operand.vmem [shape: f32[8,1], index: 2, kind: input, shape index: {}]
  %s3 = inlined_call_operand.vmem [shape: f32[2,8,270], index: 3, kind: output, shape index: {}]
  %s4 = sld [smem:[#allocation0]]
  $region45: #{conv_transpose_clamp.1} parent=0
    _
  %s6 = ssub.s32 1, %s4
  %s7 = scalar_select 0, %s6, %s4
  loop: start=0, step=1, limit=4
  $region2: #{conv_transpose_clamp.1} parent=0 // loop_pre_header
    _
  $region3: #{conv_transpose_clamp.1} parent=0 // loop_header
    %s9 = sphi 0, %s13
    %p10 = scmp.ge.s32.totalorder %s9, 4
    %s19 = sphi 0, %s21
    %s22 = sphi 0, %s19
    %s23 = sphi 0, %s22
    %s39 = sphi 0, %s23
    %s43 = sphi 0, %s43
    %s45 = sphi 0, %s43
    %s46 = sphi 0, %s45
    %s60 = sphi 0, %s46
    %s64 = sphi 0, %s64
    %s66 = sphi 0, %s64
    %s67 = sphi 0, %s66
    %s81 = sphi 0, %s67
    %s87 = sphi 0, %s89
    %s90 = sphi 0, %s87
    %s91 = sphi 0, %s90
    %s107 = sphi 0, %s91
  $region4: #{conv_transpose_clamp.1} parent=0 // loop_header_branch
    %12 = sbr.rel (%p10) target = $region8
  $region5: #{conv_transpose_clamp.1} parent=0 // loop_body
    %s14 = ssub.s32 %s9, 1
    %s15 = ssub.s32 %s9, 2
    %s16 = sadd.s32 %s9, 1
    %s17 = ssub.s32 %s9, %s16
    %p18 = scmp.eq.s32.totalorder %s17, 0
    %s20 = sadd.s32 %s19, 1
    %s21 = scalar_select %p18, %s19, %s20
    %p24 = pneg %p18
    %p25 = scmp.eq.s32.totalorder %s9, 1
    %p26 = por %p24, %p25
    %p27 = scmp.ne.s32.totalorder %s19, %s22
    %p28 = scmp.eq.s32.totalorder %s9, 0
    %p29 = por %p27, %p28
    %p30 = scmp.ne.s32.totalorder %s19, %s22
    %p31 = scmp.eq.s32.totalorder %s14, 1
    %p32 = por %p30, %p31
    %p33 = scmp.ne.s32.totalorder %s22, %s23
    %p34 = scmp.eq.s32.totalorder %s14, 0
    %p35 = por %p33, %p34
    %p36 = scmp.ne.s32.totalorder %s22, %s23
    %p37 = scmp.eq.s32.totalorder %s15, 1
    %p38 = por %p36, %p37
    %p40 = scmp.ne.s32.totalorder %s23, %s39
    %p41 = scmp.eq.s32.totalorder %s15, 0
    %p42 = por %p40, %p41
    %s44 = sadd.s32 %s43, 1
    %p47 = scmp.eq.s32.totalorder %s9, 1
    %p48 = scmp.ne.s32.totalorder %s43, %s45
    %p49 = scmp.eq.s32.totalorder %s9, 0
    %p50 = por %p48, %p49
    %p51 = scmp.ne.s32.totalorder %s43, %s45
    %p52 = scmp.eq.s32.totalorder %s14, 1
    %p53 = por %p51, %p52
    %p54 = scmp.ne.s32.totalorder %s45, %s46
    %p55 = scmp.eq.s32.totalorder %s14, 0
    %p56 = por %p54, %p55
    %p57 = scmp.ne.s32.totalorder %s45, %s46
    %p58 = scmp.eq.s32.totalorder %s15, 1
    %p59 = por %p57, %p58
    %p61 = scmp.ne.s32.totalorder %s46, %s60
    %p62 = scmp.eq.s32.totalorder %s15, 0
    %p63 = por %p61, %p62
    %s65 = sadd.s32 %s64, 1
    %p68 = scmp.eq.s32.totalorder %s9, 1
    %p69 = scmp.ne.s32.totalorder %s64, %s66
    %p70 = scmp.eq.s32.totalorder %s9, 0
    %p71 = por %p69, %p70
    %p72 = scmp.ne.s32.totalorder %s64, %s66
    %p73 = scmp.eq.s32.totalorder %s14, 1
    %p74 = por %p72, %p73
    %p75 = scmp.ne.s32.totalorder %s66, %s67
    %p76 = scmp.eq.s32.totalorder %s14, 0
    %p77 = por %p75, %p76
    %p78 = scmp.ne.s32.totalorder %s66, %s67
    %p79 = scmp.eq.s32.totalorder %s15, 1
    %p80 = por %p78, %p79
    %p82 = scmp.ne.s32.totalorder %s67, %s81
    %p83 = scmp.eq.s32.totalorder %s15, 0
    %p84 = por %p82, %p83
    %s85 = ssub.s32 %s9, %s16
    %p86 = scmp.eq.s32.totalorder %s85, 0
    %s88 = sadd.s32 %s87, 1
    %s89 = scalar_select %p86, %s87, %s88
    %p92 = pneg %p86
    %p93 = scmp.eq.s32.totalorder %s9, 1
    %p94 = por %p92, %p93
    %p95 = scmp.ne.s32.totalorder %s87, %s90
    %p96 = scmp.eq.s32.totalorder %s9, 0
    %p97 = por %p95, %p96
    %p98 = scmp.ne.s32.totalorder %s87, %s90
    %p99 = scmp.eq.s32.totalorder %s14, 1
    %p100 = por %p98, %p99
    %p101 = scmp.ne.s32.totalorder %s90, %s91
    %p102 = scmp.eq.s32.totalorder %s14, 0
    %p103 = por %p101, %p102
    %p104 = scmp.ne.s32.totalorder %s90, %s91
    %p105 = scmp.eq.s32.totalorder %s15, 1
    %p106 = por %p104, %p105
    %p108 = scmp.ne.s32.totalorder %s91, %s107
    %p109 = scmp.eq.s32.totalorder %s15, 0
    %p110 = por %p108, %p109
    %p111 = scmp.le.s32.totalorder 1, %s9
    %p112 = scmp.lt.s32.totalorder %s9, 3
    %p113 = pnand %p111, %p112
    %p114 = pneg %p113
    // Predicated region
    $region9: #{conv_transpose_clamp.1} parent=5 // pred_check
      _
    $region10: #{conv_transpose_clamp.1} parent=5 // pred_check_branch
      %116 = sbr.rel (%p113) target = $region12
    $region11: #{conv_transpose_clamp.1} parent=5 // pred_region
      %s117 = ssub.s32 %s9, 1
      // Predicated region
      $region13: #{conv_transpose_clamp.1} parent=11 // pred_check
        %p118 = pneg %p56
      $region14: #{conv_transpose_clamp.1} parent=11 // pred_check_branch
        %120 = sbr.rel (%p118) target = $region16
      $region15: #{conv_transpose_clamp.1} parent=11 // pred_region
        _
      $region16: #{conv_transpose_clamp.1} parent=11 // pred_fallthru
        _
      // Predicated region
      $region17: #{conv_transpose_clamp.1} parent=11 // pred_check
        %p121 = pneg %p77
      $region18: #{conv_transpose_clamp.1} parent=11 // pred_check_branch
        %123 = sbr.rel (%p121) target = $region20
      $region19: #{conv_transpose_clamp.1} parent=11 // pred_region
        _
      $region20: #{conv_transpose_clamp.1} parent=11 // pred_fallthru
        _
    $region12: #{conv_transpose_clamp.1} parent=5 // pred_fallthru
      _
    %p124 = scmp.lt.s32.totalorder %s9, 2
    // Predicated region
    $region21: #{conv_transpose_clamp.1} parent=5 // pred_check
      %p125 = pneg %p124
    $region22: #{conv_transpose_clamp.1} parent=5 // pred_check_branch
      %127 = sbr.rel (%p125) target = $region24
    $region23: #{conv_transpose_clamp.1} parent=5 // pred_region
      // Predicated region
      $region25: #{conv_transpose_clamp.1} parent=23 // pred_check
        %p128 = pneg %p29
      $region26: #{conv_transpose_clamp.1} parent=23 // pred_check_branch
        %130 = sbr.rel (%p128) target = $region28
      $region27: #{conv_transpose_clamp.1} parent=23 // pred_region
        %p131 = scmp.lt.s32.totalorder %s9, 1
        %s132 = scalar_select %p131, %s9, 1
        %s133 = smul.addr %s132, 3
        %s134 = scalar_lea.vmem %s0, %s133
      $region28: #{conv_transpose_clamp.1} parent=23 // pred_fallthru
        _
    $region24: #{conv_transpose_clamp.1} parent=5 // pred_fallthru
      _
    %p135 = scmp.le.s32.totalorder 1, %s9
    %p136 = scmp.lt.s32.totalorder %s9, 3
    %p137 = pnand %p135, %p136
    %p138 = pneg %p137
    // Predicated region
    $region29: #{conv_transpose_clamp.1} parent=5 // pred_check
      _
    $region30: #{conv_transpose_clamp.1} parent=5 // pred_check_branch
      %140 = sbr.rel (%p137) target = $region32
    $region31: #{conv_transpose_clamp.1} parent=5 // pred_region
      %s141 = ssub.s32 %s9, 1
      %p142 = scmp.lt.s32.totalorder %s14, 1
      %s143 = scalar_select %p142, %s14, 1
      %s144 = smul.addr %s143, 3
      %s145 = scalar_lea.vmem %s0, %s144
      %p146 = pneg %p35
      %p147 = pneg %p32
      %p148 = pneg %p56
      %p149 = pneg %p53
      %p150 = pneg %p77
      %p151 = pneg %p74
      %p152 = pneg %p103
      %p153 = pneg %p100
      %p154 = scmp.lt.s32.totalorder %s14, 1
      %s155 = scalar_select %p154, %s14, 1
      %s156 = smul.addr %s155, 3
      %s157 = smul.addr %s156, 8
      %s158 = scalar_lea.vmem %s3, %s157
      %p159 = scmp.lt.s32.totalorder %s14, 1
      %s160 = scalar_select %p159, %s14, 1
      %s161 = smul.addr %s160, 3
      %s162 = scalar_lea.vmem %s0, %s161
      %p163 = scmp.lt.s32.totalorder %s14, 1
      %s164 = scalar_select %p163, %s14, 1
      %s165 = smul.addr %s164, 3
      %s166 = smul.addr %s165, 8
      %s167 = scalar_lea.vmem %s3, %s166
      %v168 = vld [vmem:[%s162] sm:$0x7]
      %v170 = vlaneseq
      %v171 = vshrl.u32 %v170, 7
      %v172 = vsub.s32 0, %v171
      %v173 = vrot.slane %v168, %v172
      %v174 = vlaneseq
      %v175 = vshrl.u32 %v174, 7
      %v176 = vsub.s32 1, %v175
      %v177 = vrot.slane %v168, %v176
      %v178 = vlaneseq
      %v179 = vshrl.u32 %v178, 7
      %v180 = vsub.s32 2, %v179
      %v181 = vrot.slane %v168, %v180
      %185 = vrot.lane.b32.xlu0 %v173, 127
      %v186 = vpop.permute.xlu0 %185
      %187 = vrot.lane.b32.xlu0 %v177, 127
      %v188 = vpop.permute.xlu0 %187
      %189 = vrot.lane.b32.xlu0 %v181, 127
      %v190 = vpop.permute.xlu0 %189
      %vm191 = vcmask 1039360
      %v192 = vsel %vm191, %v186, %v188
      %v193 = vsel %vm191, %v188, %v190
      %197 = vrot.lane.b32.xlu0 %v173, 126
      %v198 = vpop.permute.xlu0 %197
      %199 = vrot.lane.b32.xlu0 %v177, 126
      %v200 = vpop.permute.xlu0 %199
      %201 = vrot.lane.b32.xlu0 %v181, 126
      %v202 = vpop.permute.xlu0 %201
      %vm203 = vcmask 1031168
      %v204 = vsel %vm203, %v198, %v200
      %v205 = vsel %vm203, %v200, %v202
      %209 = vrot.lane.b32.xlu0 %v173, 125
      %v210 = vpop.permute.xlu0 %209
      %211 = vrot.lane.b32.xlu0 %v177, 125
      %v212 = vpop.permute.xlu0 %211
      %213 = vrot.lane.b32.xlu0 %v181, 125
      %v214 = vpop.permute.xlu0 %213
      %vm215 = vcmask 1022976
      %v216 = vsel %vm215, %v210, %v212
      %v217 = vsel %vm215, %v212, %v214
      %221 = vrot.lane.b32.xlu0 %v173, 110
      %v222 = vpop.permute.xlu0 %221
      %223 = vrot.lane.b32.xlu0 %v177, 110
      %v224 = vpop.permute.xlu0 %223
      %225 = vrot.lane.b32.xlu0 %v181, 110
      %v226 = vpop.permute.xlu0 %225
      %vm227 = vcmask 900096
      %v228 = vsel %vm227, %v222, %v224
      %v229 = vsel %vm227, %v224, %v226
      %233 = vrot.lane.b32.xlu0 %v173, 109
      %v234 = vpop.permute.xlu0 %233
      %235 = vrot.lane.b32.xlu0 %v177, 109
      %v236 = vpop.permute.xlu0 %235
      %237 = vrot.lane.b32.xlu0 %v181, 109
      %v238 = vpop.permute.xlu0 %237
      %vm239 = vcmask 891904
      %v240 = vsel %vm239, %v234, %v236
      %v241 = vsel %vm239, %v236, %v238
      %245 = vrot.lane.b32.xlu0 %v173, 108
      %v246 = vpop.permute.xlu0 %245
      %247 = vrot.lane.b32.xlu0 %v177, 108
      %v248 = vpop.permute.xlu0 %247
      %249 = vrot.lane.b32.xlu0 %v181, 108
      %v250 = vpop.permute.xlu0 %249
      %vm251 = vcmask 883712
      %v252 = vsel %vm251, %v246, %v248
      %v253 = vsel %vm251, %v248, %v250
      %257 = vrot.lane.b32.xlu0 %v173, 107
      %v258 = vpop.permute.xlu0 %257
      %259 = vrot.lane.b32.xlu0 %v177, 107
      %v260 = vpop.permute.xlu0 %259
      %261 = vrot.lane.b32.xlu0 %v181, 107
      %v262 = vpop.permute.xlu0 %261
      %vm263 = vcmask 875520
      %v264 = vsel %vm263, %v258, %v260
      %v265 = vsel %vm263, %v260, %v262
      %269 = vrot.lane.b32.xlu0 %v173, 92
      %v270 = vpop.permute.xlu0 %269
      %271 = vrot.lane.b32.xlu0 %v177, 92
      %v272 = vpop.permute.xlu0 %271
      %273 = vrot.lane.b32.xlu0 %v181, 92
      %v274 = vpop.permute.xlu0 %273
      %vm275 = vcmask 752640
      %v276 = vsel %vm275, %v270, %v272
      %v277 = vsel %vm275, %v272, %v274
      %281 = vrot.lane.b32.xlu0 %v173, 91
      %v282 = vpop.permute.xlu0 %281
      %283 = vrot.lane.b32.xlu0 %v177, 91
      %v284 = vpop.permute.xlu0 %283
      %285 = vrot.lane.b32.xlu0 %v181, 91
      %v286 = vpop.permute.xlu0 %285
      %vm287 = vcmask 744448
      %v288 = vsel %vm287, %v282, %v284
      %v289 = vsel %vm287, %v284, %v286
      %293 = vrot.lane.b32.xlu0 %v173, 90
      %v294 = vpop.permute.xlu0 %293
      %295 = vrot.lane.b32.xlu0 %v177, 90
      %v296 = vpop.permute.xlu0 %295
      %297 = vrot.lane.b32.xlu0 %v181, 90
      %v298 = vpop.permute.xlu0 %297
      %vm299 = vcmask 736256
      %v300 = vsel %vm299, %v294, %v296
      %v301 = vsel %vm299, %v296, %v298
      %305 = vrot.lane.b32.xlu0 %v173, 89
      %v306 = vpop.permute.xlu0 %305
      %307 = vrot.lane.b32.xlu0 %v177, 89
      %v308 = vpop.permute.xlu0 %307
      %309 = vrot.lane.b32.xlu0 %v181, 89
      %v310 = vpop.permute.xlu0 %309
      %vm311 = vcmask 728064
      %v312 = vsel %vm311, %v306, %v308
      %v313 = vsel %vm311, %v308, %v310
      %317 = vrot.lane.b32.xlu0 %v173, 74
      %v318 = vpop.permute.xlu0 %317
      %319 = vrot.lane.b32.xlu0 %v177, 74
      %v320 = vpop.permute.xlu0 %319
      %321 = vrot.lane.b32.xlu0 %v181, 74
      %v322 = vpop.permute.xlu0 %321
      %vm323 = vcmask 605184
      %v324 = vsel %vm323, %v318, %v320
      %v325 = vsel %vm323, %v320, %v322
      %329 = vrot.lane.b32.xlu0 %v173, 73
      %v330 = vpop.permute.xlu0 %329
      %331 = vrot.lane.b32.xlu0 %v177, 73
      %v332 = vpop.permute.xlu0 %331
      %333 = vrot.lane.b32.xlu0 %v181, 73
      %v334 = vpop.permute.xlu0 %333
      %vm335 = vcmask 596992
      %v336 = vsel %vm335, %v330, %v332
      %v337 = vsel %vm335, %v332, %v334
      %341 = vrot.lane.b32.xlu0 %v173, 72
      %v342 = vpop.permute.xlu0 %341
      %343 = vrot.lane.b32.xlu0 %v177, 72
      %v344 = vpop.permute.xlu0 %343
      %345 = vrot.lane.b32.xlu0 %v181, 72
      %v346 = vpop.permute.xlu0 %345
      %vm347 = vcmask 588800
      %v348 = vsel %vm347, %v342, %v344
      %v349 = vsel %vm347, %v344, %v346
      %353 = vrot.lane.b32.xlu0 %v173, 71
      %v354 = vpop.permute.xlu0 %353
      %355 = vrot.lane.b32.xlu0 %v177, 71
      %v356 = vpop.permute.xlu0 %355
      %357 = vrot.lane.b32.xlu0 %v181, 71
      %v358 = vpop.permute.xlu0 %357
      %vm359 = vcmask 580608
      %v360 = vsel %vm359, %v354, %v356
      %v361 = vsel %vm359, %v356, %v358
      %vm365 = vcmask 1040384
      %v366 = vsel %vm365, %v173, %v192
      %v367 = vsel %vm365, %v177, %v193
      %v368 = vsel %vm365, %v181, %v190
      %vm369 = vcmask 1041408
      %v370 = vsel %vm369, %v366, %v204
      %v371 = vsel %vm369, %v367, %v205
      %v372 = vsel %vm369, %v368, %v202
      %vm373 = vcmask 1042432
      %v374 = vsel %vm373, %v370, %v216
      %v375 = vsel %vm373, %v371, %v217
      %v376 = vsel %vm373, %v372, %v214
      %vm377 = vcmask 1043456
      %v378 = vsel %vm377, %v374, %v228
      %v379 = vsel %vm377, %v375, %v229
      %v380 = vsel %vm377, %v376, %v226
      %vm381 = vcmask 1044480
      %v382 = vsel %vm381, %v378, %v240
      %v383 = vsel %vm381, %v379, %v241
      %v384 = vsel %vm381, %v380, %v238
      %vm385 = vcmask 1045504
      %v386 = vsel %vm385, %v382, %v252
      %v387 = vsel %vm385, %v383, %v253
      %v388 = vsel %vm385, %v384, %v250
      %vm389 = vcmask 1046528
      %v390 = vsel %vm389, %v386, %v264
      %v391 = vsel %vm389, %v387, %v265
      %v392 = vsel %vm389, %v388, %v262
      %v393 = vsel %vm365, %v276, %v288
      %v394 = vsel %vm365, %v277, %v289
      %v395 = vsel %vm365, %v274, %v286
      %v396 = vsel %vm369, %v393, %v300
      %v397 = vsel %vm369, %v394, %v301
      %v398 = vsel %vm369, %v395, %v298
      %v399 = vsel %vm373, %v396, %v312
      %v400 = vsel %vm373, %v397, %v313
      %v401 = vsel %vm373, %v398, %v310
      %v402 = vsel %vm377, %v399, %v324
      %v403 = vsel %vm377, %v400, %v325
      %v404 = vsel %vm377, %v401, %v322
      %v405 = vsel %vm381, %v402, %v336
      %v406 = vsel %vm381, %v403, %v337
      %v407 = vsel %vm381, %v404, %v334
      %v408 = vsel %vm385, %v405, %v348
      %v409 = vsel %vm385, %v406, %v349
      %v410 = vsel %vm385, %v407, %v346
      %v411 = vsel %vm389, %v408, %v360
      %v412 = vsel %vm389, %v409, %v361
      %v413 = vsel %vm389, %v410, %v358
      %v414 = vld [vmem:[%s1] sm:$0xff]
      %v415 = vld [vmem:[%s2] sm:$0xff]
      %417 = vset.pattern.permute.xlu0 0
      %418 = vperm.xlu0 %417, %v415
      %v419 = vpop.permute.xlu0 %418
      %vm421 = vcmask 130048
      %v423 = vsel %vm421, %v414, 0
      %v425 = vand.u32 %v391, 4294901760
      %426 = vmatprep.subr.mxu0 %v425
      %v427 = vand.u32 %v390, 4294901760
      %428 = vmatpush1.msra.mxu0 %v427
      %v429 = vand.u32 %v412, 4294901760
      %430 = vmatprep.subr.mxu0 %v429
      %v431 = vand.u32 %v411, 4294901760
      %432 = vmatpush1.msra.mxu0 %v431
      %433 = vmatprep.subr.mxu0 0.0
      %434 = vmatpush1.msra.mxu0 0.0
      %435 = vmatprep.subr.mxu0 0.0
      %436 = vmatpush1.msra.mxu0 0.0
      %437 = vmatprep.subr.mxu0 0.0
      %438 = vmatpush1.msra.mxu0 0.0
      %439 = vmatprep.subr.mxu0 0.0
      %440 = vmatpush1.msra.mxu0 0.0
      %441 = vmatprep.subr.mxu0 0.0
      %442 = vmatpush1.msra.mxu0 0.0
      %443 = vmatprep.subr.mxu0 0.0
      %444 = vmatpush1.msra.mxu0 0.0
      %445 = vmatprep.subr.mxu0 0.0
      %446 = vmatpush1.msra.mxu0 0.0
      %447 = vmatprep.subr.mxu0 0.0
      %448 = vmatpush1.msra.mxu0 0.0
      %449 = vmatprep.subr.mxu0 0.0
      %450 = vmatpush1.msra.mxu0 0.0
      %451 = vmatprep.subr.mxu0 0.0
      %452 = vmatpush1.msra.mxu0 0.0
      %453 = vmatprep.subr.mxu0 0.0
      %454 = vmatpush1.msra.mxu0 0.0
      %455 = vmatprep.subr.mxu0 0.0
      %456 = vmatpush1.msra.mxu0 0.0
      %457 = vmatprep.subr.mxu0 0.0
      %458 = vmatpush1.msra.mxu0 0.0
      %459 = vmatprep.subr.mxu0 0.0
      %460 = vmatpush1.msra.mxu0 0.0
      %461 = vmatprep.subr.mxu0 0.0
      %462 = vmatpush1.msra.mxu0 0.0
      %463 = vmatprep.subr.mxu0 0.0
      %464 = vmatpush1.msra.mxu0 0.0
      %465 = vmatprep.subr.mxu0 0.0
      %466 = vmatpush1.msra.mxu0 0.0
      %467 = vmatprep.subr.mxu0 0.0
      %468 = vmatpush1.msra.mxu0 0.0
      %469 = vmatprep.subr.mxu0 0.0
      %470 = vmatpush1.msra.mxu0 0.0
      %471 = vmatprep.subr.mxu0 0.0
      %472 = vmatpush1.msra.mxu0 0.0
      %473 = vmatprep.subr.mxu0 0.0
      %474 = vmatpush1.msra.mxu0 0.0
      %475 = vmatprep.subr.mxu0 0.0
      %476 = vmatpush1.msra.mxu0 0.0
      %477 = vmatprep.subr.mxu0 0.0
      %478 = vmatpush1.msra.mxu0 0.0
      %479 = vmatprep.subr.mxu0 0.0
      %480 = vmatpush1.msra.mxu0 0.0
      %481 = vmatprep.subr.mxu0 0.0
      %482 = vmatpush1.msra.mxu0 0.0
      %483 = vmatprep.subr.mxu0 0.0
      %484 = vmatpush1.msra.mxu0 0.0
      %485 = vmatprep.subr.mxu0 0.0
      %486 = vmatpush1.msra.mxu0 0.0
      %487 = vmatprep.subr.mxu0 0.0
      %488 = vmatpush1.msra.mxu0 0.0
      %489 = vmatprep.subr.mxu0 0.0
      %490 = vmatpush1.msra.mxu0 0.0
      %491 = vmatprep.subr.mxu0 0.0
      %492 = vmatpush1.msra.mxu0 0.0
      %493 = vmatprep.mubr.f32.mxu0 0.0
      %v494 = vand.u32 %v423, 4294901760
      %v495 = vsub.f32 %v423, %v494
      %v496 = vand.u32 %v495, 4294901760
      %v497 = vsub.f32 %v495, %v496
      %v498 = vand.u32 %v497, 4294901760
      %499 = vmatmul.mubr.f32.gmra.mrb[0].mxu0 %v498
      %v500 = vpop.f32.mrb[0].mxu0
      %v501 = vadd.f32 %v419, %v500
      %v502 = vpop.f32.mrb[0].mxu0
      %v503 = vadd.f32 %v419, %v502
      %504 = vdwg.mxu0
      %v505 = vand.u32 %v391, 4294901760
      %v506 = vsub.f32 %v391, %v505
      %v507 = vand.u32 %v506, 4294901760
      %v508 = vsub.f32 %v506, %v507
      %v509 = vand.u32 %v508, 4294901760
      %510 = vmatprep.subr.mxu0 %v509
      %v511 = vand.u32 %v390, 4294901760
      %v512 = vsub.f32 %v390, %v511
      %v513 = vand.u32 %v512, 4294901760
      %v514 = vsub.f32 %v512, %v513
      %v515 = vand.u32 %v514, 4294901760
      %516 = vmatpush1.msra.mxu0 %v515
      %v517 = vand.u32 %v412, 4294901760
      %v518 = vsub.f32 %v412, %v517
      %v519 = vand.u32 %v518, 4294901760
      %v520 = vsub.f32 %v518, %v519
      %v521 = vand.u32 %v520, 4294901760
      %522 = vmatprep.subr.mxu0 %v521
      %v523 = vand.u32 %v411, 4294901760
      %v524 = vsub.f32 %v411, %v523
      %v525 = vand.u32 %v524, 4294901760
      %v526 = vsub.f32 %v524, %v525
      %v527 = vand.u32 %v526, 4294901760
      %528 = vmatpush1.msra.mxu0 %v527
      %529 = vmatprep.subr.mxu0 0.0
      %530 = vmatpush1.msra.mxu0 0.0
      %531 = vmatprep.subr.mxu0 0.0
      %532 = vmatpush1.msra.mxu0 0.0
      %533 = vmatprep.subr.mxu0 0.0
      %534 = vmatpush1.msra.mxu0 0.0
      %535 = vmatprep.subr.mxu0 0.0
      %536 = vmatpush1.msra.mxu0 0.0
      %537 = vmatprep.subr.mxu0 0.0
      %538 = vmatpush1.msra.mxu0 0.0
      %539 = vmatprep.subr.mxu0 0.0
      %540 = vmatpush1.msra.mxu0 0.0
      %541 = vmatprep.subr.mxu0 0.0
      %542 = vmatpush1.msra.mxu0 0.0
      %543 = vmatprep.subr.mxu0 0.0
      %544 = vmatpush1.msra.mxu0 0.0
      %545 = vmatprep.subr.mxu0 0.0
      %546 = vmatpush1.msra.mxu0 0.0
      %547 = vmatprep.subr.mxu0 0.0
      %548 = vmatpush1.msra.mxu0 0.0
      %549 = vmatprep.subr.mxu0 0.0
      %550 = vmatpush1.msra.mxu0 0.0
      %551 = vmatprep.subr.mxu0 0.0
      %552 = vmatpush1.msra.mxu0 0.0
      %553 = vmatprep.subr.mxu0 0.0
      %554 = vmatpush1.msra.mxu0 0.0
      %555 = vmatprep.subr.mxu0 0.0
      %556 = vmatpush1.msra.mxu0 0.0
      %557 = vmatprep.subr.mxu0 0.0
      %558 = vmatpush1.msra.mxu0 0.0
      %559 = vmatprep.subr.mxu0 0.0
      %560 = vmatpush1.msra.mxu0 0.0
      %561 = vmatprep.subr.mxu0 0.0
      %562 = vmatpush1.msra.mxu0 0.0
      %563 = vmatprep.subr.mxu0 0.0
      %564 = vmatpush1.msra.mxu0 0.0
      %565 = vmatprep.subr.mxu0 0.0
      %566 = vmatpush1.msra.mxu0 0.0
      %567 = vmatprep.subr.mxu0 0.0
      %568 = vmatpush1.msra.mxu0 0.0
      %569 = vmatprep.subr.mxu0 0.0
      %570 = vmatpush1.msra.mxu0 0.0
      %571 = vmatprep.subr.mxu0 0.0
      %572 = vmatpush1.msra.mxu0 0.0
      %573 = vmatprep.subr.mxu0 0.0
      %574 = vmatpush1.msra.mxu0 0.0
      %575 = vmatprep.subr.mxu0 0.0
      %576 = vmatpush1.msra.mxu0 0.0
      %577 = vmatprep.subr.mxu0 0.0
      %578 = vmatpush1.msra.mxu0 0.0
      %579 = vmatprep.subr.mxu0 0.0
      %580 = vmatpush1.msra.mxu0 0.0
      %581 = vmatprep.subr.mxu0 0.0
      %582 = vmatpush1.msra.mxu0 0.0
      %583 = vmatprep.subr.mxu0 0.0
      %584 = vmatpush1.msra.mxu0 0.0
      %585 = vmatprep.subr.mxu0 0.0
      %586 = vmatpush1.msra.mxu0 0.0
      %587 = vmatprep.subr.mxu0 0.0
      %588 = vmatpush1.msra.mxu0 0.0
      %589 = vmatprep.mubr.f32.mxu0 0.0
      %v590 = vand.u32 %v423, 4294901760
      %591 = vmatmul.mubr.f32.gmra.mrb[0].mxu0 %v590
      %v592 = vpop.f32.mrb[0].mxu0
      %v593 = vadd.f32 %v501, %v592
      %v594 = vpop.f32.mrb[0].mxu0
      %v595 = vadd.f32 %v503, %v594
      %596 = vdwg.mxu0
      %v597 = vand.u32 %v391, 4294901760
      %v598 = vsub.f32 %v391, %v597
      %599 = vmatprep.subr.mxu0 %v598
      %v600 = vand.u32 %v390, 4294901760
      %v601 = vsub.f32 %v390, %v600
      %602 = vmatpush1.msra.mxu0 %v601
      %v603 = vand.u32 %v412, 4294901760
      %v604 = vsub.f32 %v412, %v603
      %605 = vmatprep.subr.mxu0 %v604
      %v606 = vand.u32 %v411, 4294901760
      %v607 = vsub.f32 %v411, %v606
      %608 = vmatpush1.msra.mxu0 %v607
      %609 = vmatprep.subr.mxu0 0.0
      %610 = vmatpush1.msra.mxu0 0.0
      %611 = vmatprep.subr.mxu0 0.0
      %612 = vmatpush1.msra.mxu0 0.0
      %613 = vmatprep.subr.mxu0 0.0
      %614 = vmatpush1.msra.mxu0 0.0
      %615 = vmatprep.subr.mxu0 0.0
      %616 = vmatpush1.msra.mxu0 0.0
      %617 = vmatprep.subr.mxu0 0.0
      %618 = vmatpush1.msra.mxu0 0.0
      %619 = vmatprep.subr.mxu0 0.0
      %620 = vmatpush1.msra.mxu0 0.0
      %621 = vmatprep.subr.mxu0 0.0
      %622 = vmatpush1.msra.mxu0 0.0
      %623 = vmatprep.subr.mxu0 0.0
      %624 = vmatpush1.msra.mxu0 0.0
      %625 = vmatprep.subr.mxu0 0.0
      %626 = vmatpush1.msra.mxu0 0.0
      %627 = vmatprep.subr.mxu0 0.0
      %628 = vmatpush1.msra.mxu0 0.0
      %629 = vmatprep.subr.mxu0 0.0
      %630 = vmatpush1.msra.mxu0 0.0
      %631 = vmatprep.subr.mxu0 0.0
      %632 = vmatpush1.msra.mxu0 0.0
      %633 = vmatprep.subr.mxu0 0.0
      %634 = vmatpush1.msra.mxu0 0.0
      %635 = vmatprep.subr.mxu0 0.0
      %636 = vmatpush1.msra.mxu0 0.0
      %637 = vmatprep.subr.mxu0 0.0
      %638 = vmatpush1.msra.mxu0 0.0
      %639 = vmatprep.subr.mxu0 0.0
      %640 = vmatpush1.msra.mxu0 0.0
      %641 = vmatprep.subr.mxu0 0.0
      %642 = vmatpush1.msra.mxu0 0.0
      %643 = vmatprep.subr.mxu0 0.0
      %644 = vmatpush1.msra.mxu0 0.0
      %645 = vmatprep.subr.mxu0 0.0
      %646 = vmatpush1.msra.mxu0 0.0
      %647 = vmatprep.subr.mxu0 0.0
      %648 = vmatpush1.msra.mxu0 0.0
      %649 = vmatprep.subr.mxu0 0.0
      %650 = vmatpush1.msra.mxu0 0.0
      %651 = vmatprep.subr.mxu0 0.0
      %652 = vmatpush1.msra.mxu0 0.0
      %653 = vmatprep.subr.mxu0 0.0
      %654 = vmatpush1.msra.mxu0 0.0
      %655 = vmatprep.subr.mxu0 0.0
      %656 = vmatpush1.msra.mxu0 0.0
      %657 = vmatprep.subr.mxu0 0.0
      %658 = vmatpush1.msra.mxu0 0.0
      %659 = vmatprep.subr.mxu0 0.0
      %660 = vmatpush1.msra.mxu0 0.0
      %661 = vmatprep.subr.mxu0 0.0
      %662 = vmatpush1.msra.mxu0 0.0
      %663 = vmatprep.subr.mxu0 0.0
      %664 = vmatpush1.msra.mxu0 0.0
      %665 = vmatprep.subr.mxu0 0.0
      %666 = vmatpush1.msra.mxu0 0.0
      %667 = vmatprep.subr.mxu0 0.0
      %668 = vmatpush1.msra.mxu0 0.0
      %669 = vmatprep.mubr.f32.mxu0 0.0
      %v670 = vand.u32 %v423, 4294901760
      %v671 = vsub.f32 %v423, %v670
      %672 = vmatmul.mubr.f32.gmra.mrb[0].mxu0 %v671
      %v673 = vpop.f32.mrb[0].mxu0
      %v674 = vadd.f32 %v593, %v673
      %v675 = vpop.f32.mrb[0].mxu0
      %v676 = vadd.f32 %v595, %v675
      %677 = vdwg.mxu0
      %v678 = vand.u32 %v391, 4294901760
      %679 = vmatprep.subr.mxu0 %v678
      %v680 = vand.u32 %v390, 4294901760
      %681 = vmatpush1.msra.mxu0 %v680
      %v682 = vand.u32 %v412, 4294901760
      %683 = vmatprep.subr.mxu0 %v682
      %v684 = vand.u32 %v411, 4294901760
      %685 = vmatpush1.msra.mxu0 %v684
      %686 = vmatprep.subr.mxu0 0.0
      %687 = vmatpush1.msra.mxu0 0.0
      %688 = vmatprep.subr.mxu0 0.0
      %689 = vmatpush1.msra.mxu0 0.0
      %690 = vmatprep.subr.mxu0 0.0
      %691 = vmatpush1.msra.mxu0 0.0
      %692 = vmatprep.subr.mxu0 0.0
      %693 = vmatpush1.msra.mxu0 0.0
      %694 = vmatprep.subr.mxu0 0.0
      %695 = vmatpush1.msra.mxu0 0.0
      %696 = vmatprep.subr.mxu0 0.0
      %697 = vmatpush1.msra.mxu0 0.0
      %698 = vmatprep.subr.mxu0 0.0
      %699 = vmatpush1.msra.mxu0 0.0
      %700 = vmatprep.subr.mxu0 0.0
      %701 = vmatpush1.msra.mxu0 0.0
      %702 = vmatprep.subr.mxu0 0.0
      %703 = vmatpush1.msra.mxu0 0.0
      %704 = vmatprep.subr.mxu0 0.0
      %705 = vmatpush1.msra.mxu0 0.0
      %706 = vmatprep.subr.mxu0 0.0
      %707 = vmatpush1.msra.mxu0 0.0
      %708 = vmatprep.subr.mxu0 0.0
      %709 = vmatpush1.msra.mxu0 0.0
      %710 = vmatprep.subr.mxu0 0.0
      %711 = vmatpush1.msra.mxu0 0.0
      %712 = vmatprep.subr.mxu0 0.0
      %713 = vmatpush1.msra.mxu0 0.0
      %714 = vmatprep.subr.mxu0 0.0
      %715 = vmatpush1.msra.mxu0 0.0
      %716 = vmatprep.subr.mxu0 0.0
      %717 = vmatpush1.msra.mxu0 0.0
      %718 = vmatprep.subr.mxu0 0.0
      %719 = vmatpush1.msra.mxu0 0.0
      %720 = vmatprep.subr.mxu0 0.0
      %721 = vmatpush1.msra.mxu0 0.0
      %722 = vmatprep.subr.mxu0 0.0
      %723 = vmatpush1.msra.mxu0 0.0
      %724 = vmatprep.subr.mxu0 0.0
      %725 = vmatpush1.msra.mxu0 0.0
      %726 = vmatprep.subr.mxu0 0.0
      %727 = vmatpush1.msra.mxu0 0.0
      %728 = vmatprep.subr.mxu0 0.0
      %729 = vmatpush1.msra.mxu0 0.0
      %730 = vmatprep.subr.mxu0 0.0
      %731 = vmatpush1.msra.mxu0 0.0
      %732 = vmatprep.subr.mxu0 0.0
      %733 = vmatpush1.msra.mxu0 0.0
      %734 = vmatprep.subr.mxu0 0.0
      %735 = vmatpush1.msra.mxu0 0.0
      %736 = vmatprep.subr.mxu0 0.0
      %737 = vmatpush1.msra.mxu0 0.0
      %738 = vmatprep.subr.mxu0 0.0
      %739 = vmatpush1.msra.mxu0 0.0
      %740 = vmatprep.subr.mxu0 0.0
      %741 = vmatpush1.msra.mxu0 0.0
      %742 = vmatprep.subr.mxu0 0.0
      %743 = vmatpush1.msra.mxu0 0.0
      %744 = vmatprep.subr.mxu0 0.0
      %745 = vmatpush1.msra.mxu0 0.0
      %746 = vmatprep.mubr.f32.mxu0 0.0
      %v747 = vand.u32 %v423, 4294901760
      %v748 = vsub.f32 %v423, %v747
      %v749 = vand.u32 %v748, 4294901760
      %750 = vmatmul.mubr.f32.gmra.mrb[0].mxu0 %v749
      %v751 = vpop.f32.mrb[0].mxu0
      %v752 = vadd.f32 %v674, %v751
      %v753 = vpop.f32.mrb[0].mxu0
      %v754 = vadd.f32 %v676, %v753
      %755 = vdwg.mxu0
      %v756 = vand.u32 %v391, 4294901760
      %v757 = vsub.f32 %v391, %v756
      %v758 = vand.u32 %v757, 4294901760
      %759 = vmatprep.subr.mxu0 %v758
      %v760 = vand.u32 %v390, 4294901760
      %v761 = vsub.f32 %v390, %v760
      %v762 = vand.u32 %v761, 4294901760
      %763 = vmatpush1.msra.mxu0 %v762
      %v764 = vand.u32 %v412, 4294901760
      %v765 = vsub.f32 %v412, %v764
      %v766 = vand.u32 %v765, 4294901760
      %767 = vmatprep.subr.mxu0 %v766
      %v768 = vand.u32 %v411, 4294901760
      %v769 = vsub.f32 %v411, %v768
      %v770 = vand.u32 %v769, 4294901760
      %771 = vmatpush1.msra.mxu0 %v770
      %772 = vmatprep.subr.mxu0 0.0
      %773 = vmatpush1.msra.mxu0 0.0
      %774 = vmatprep.subr.mxu0 0.0
      %775 = vmatpush1.msra.mxu0 0.0
      %776 = vmatprep.subr.mxu0 0.0
      %777 = vmatpush1.msra.mxu0 0.0
      %778 = vmatprep.subr.mxu0 0.0
      %779 = vmatpush1.msra.mxu0 0.0
      %780 = vmatprep.subr.mxu0 0.0
      %781 = vmatpush1.msra.mxu0 0.0
      %782 = vmatprep.subr.mxu0 0.0
      %783 = vmatpush1.msra.mxu0 0.0
      %784 = vmatprep.subr.mxu0 0.0
      %785 = vmatpush1.msra.mxu0 0.0
      %786 = vmatprep.subr.mxu0 0.0
      %787 = vmatpush1.msra.mxu0 0.0
      %788 = vmatprep.subr.mxu0 0.0
      %789 = vmatpush1.msra.mxu0 0.0
      %790 = vmatprep.subr.mxu0 0.0
      %791 = vmatpush1.msra.mxu0 0.0
      %792 = vmatprep.subr.mxu0 0.0
      %793 = vmatpush1.msra.mxu0 0.0
      %794 = vmatprep.subr.mxu0 0.0
      %795 = vmatpush1.msra.mxu0 0.0
      %796 = vmatprep.subr.mxu0 0.0
      %797 = vmatpush1.msra.mxu0 0.0
      %798 = vmatprep.subr.mxu0 0.0
      %799 = vmatpush1.msra.mxu0 0.0
      %800 = vmatprep.subr.mxu0 0.0
      %801 = vmatpush1.msra.mxu0 0.0
      %802 = vmatprep.subr.mxu0 0.0
      %803 = vmatpush1.msra.mxu0 0.0
      %804 = vmatprep.subr.mxu0 0.0
      %805 = vmatpush1.msra.mxu0 0.0
      %806 = vmatprep.subr.mxu0 0.0
      %807 = vmatpush1.msra.mxu0 0.0
      %808 = vmatprep.subr.mxu0 0.0
      %809 = vmatpush1.msra.mxu0 0.0
      %810 = vmatprep.subr.mxu0 0.0
      %811 = vmatpush1.msra.mxu0 0.0
      %812 = vmatprep.subr.mxu0 0.0
      %813 = vmatpush1.msra.mxu0 0.0
      %814 = vmatprep.subr.mxu0 0.0
      %815 = vmatpush1.msra.mxu0 0.0
      %816 = vmatprep.subr.mxu0 0.0
      %817 = vmatpush1.msra.mxu0 0.0
      %818 = vmatprep.subr.mxu0 0.0
      %819 = vmatpush1.msra.mxu0 0.0
      %820 = vmatprep.subr.mxu0 0.0
      %821 = vmatpush1.msra.mxu0 0.0
      %822 = vmatprep.subr.mxu0 0.0
      %823 = vmatpush1.msra.mxu0 0.0
      %824 = vmatprep.subr.mxu0 0.0
      %825 = vmatpush1.msra.mxu0 0.0
      %826 = vmatprep.subr.mxu0 0.0
      %827 = vmatpush1.msra.mxu0 0.0
      %828 = vmatprep.subr.mxu0 0.0
      %829 = vmatpush1.msra.mxu0 0.0
      %830 = vmatprep.subr.mxu0 0.0
      %831 = vmatpush1.msra.mxu0 0.0
      %832 = vmatprep.mubr.f32.mxu0 0.0
      %v833 = vand.u32 %v423, 4294901760
      %834 = vmatmul.mubr.f32.gmra.mrb[0].mxu0 %v833
      %v835 = vpop.f32.mrb[0].mxu0
      %v836 = vadd.f32 %v752, %v835
      %v837 = vpop.f32.mrb[0].mxu0
      %v838 = vadd.f32 %v754, %v837
      %839 = vdwg.mxu0
      %v840 = vand.u32 %v391, 4294901760
      %841 = vmatprep.subr.mxu0 %v840
      %v842 = vand.u32 %v390, 4294901760
      %843 = vmatpush1.msra.mxu0 %v842
      %v844 = vand.u32 %v412, 4294901760
      %845 = vmatprep.subr.mxu0 %v844
      %v846 = vand.u32 %v411, 4294901760
      %847 = vmatpush1.msra.mxu0 %v846
      %848 = vmatprep.subr.mxu0 0.0
      %849 = vmatpush1.msra.mxu0 0.0
      %850 = vmatprep.subr.mxu0 0.0
      %851 = vmatpush1.msra.mxu0 0.0
      %852 = vmatprep.subr.mxu0 0.0
      %853 = vmatpush1.msra.mxu0 0.0
      %854 = vmatprep.subr.mxu0 0.0
      %855 = vmatpush1.msra.mxu0 0.0
      %856 = vmatprep.subr.mxu0 0.0
      %857 = vmatpush1.msra.mxu0 0.0
      %858 = vmatprep.subr.mxu0 0.0
      %859 = vmatpush1.msra.mxu0 0.0
      %860 = vmatprep.subr.mxu0 0.0
      %861 = vmatpush1.msra.mxu0 0.0
      %862 = vmatprep.subr.mxu0 0.0
      %863 = vmatpush1.msra.mxu0 0.0
      %864 = vmatprep.subr.mxu0 0.0
      %865 = vmatpush1.msra.mxu0 0.0
      %866 = vmatprep.subr.mxu0 0.0
      %867 = vmatpush1.msra.mxu0 0.0
      %868 = vmatprep.subr.mxu0 0.0
      %869 = vmatpush1.msra.mxu0 0.0
      %870 = vmatprep.subr.mxu0 0.0
      %871 = vmatpush1.msra.mxu0 0.0
      %872 = vmatprep.subr.mxu0 0.0
      %873 = vmatpush1.msra.mxu0 0.0
      %874 = vmatprep.subr.mxu0 0.0
      %875 = vmatpush1.msra.mxu0 0.0
      %876 = vmatprep.subr.mxu0 0.0
      %877 = vmatpush1.msra.mxu0 0.0
      %878 = vmatprep.subr.mxu0 0.0
      %879 = vmatpush1.msra.mxu0 0.0
      %880 = vmatprep.subr.mxu0 0.0
      %881 = vmatpush1.msra.mxu0 0.0
      %882 = vmatprep.subr.mxu0 0.0
      %883 = vmatpush1.msra.mxu0 0.0
      %884 = vmatprep.subr.mxu0 0.0
      %885 = vmatpush1.msra.mxu0 0.0
      %886 = vmatprep.subr.mxu0 0.0
      %887 = vmatpush1.msra.mxu0 0.0
      %888 = vmatprep.subr.mxu0 0.0
      %889 = vmatpush1.msra.mxu0 0.0
      %890 = vmatprep.subr.mxu0 0.0
      %891 = vmatpush1.msra.mxu0 0.0
      %892 = vmatprep.subr.mxu0 0.0
      %893 = vmatpush1.msra.mxu0 0.0
      %894 = vmatprep.subr.mxu0 0.0
      %895 = vmatpush1.msra.mxu0 0.0
      %896 = vmatprep.subr.mxu0 0.0
      %897 = vmatpush1.msra.mxu0 0.0
      %898 = vmatprep.subr.mxu0 0.0
      %899 = vmatpush1.msra.mxu0 0.0
      %900 = vmatprep.subr.mxu0 0.0
      %901 = vmatpush1.msra.mxu0 0.0
      %902 = vmatprep.subr.mxu0 0.0
      %903 = vmatpush1.msra.mxu0 0.0
      %904 = vmatprep.subr.mxu0 0.0
      %905 = vmatpush1.msra.mxu0 0.0
      %906 = vmatprep.subr.mxu0 0.0
      %907 = vmatpush1.msra.mxu0 0.0
      %908 = vmatprep.mubr.f32.mxu0 0.0
      %v909 = vand.u32 %v423, 4294901760
      %910 = vmatmul.mubr.f32.gmra.mrb[0].mxu0 %v909
      %v911 = vpop.f32.mrb[0].mxu0
      %v912 = vadd.f32 %v836, %v911
      %v913 = vpop.f32.mrb[0].mxu0
      %v914 = vadd.f32 %v838, %v913
      %915 = vdwg.mxu0
      %916 = vmatprep.subr.mxu0 0.0
      %v917 = vand.u32 %v392, 4294901760
      %918 = vmatpush1.msra.mxu0 %v917
      %919 = vmatprep.subr.mxu0 0.0
      %v920 = vand.u32 %v413, 4294901760
      %921 = vmatpush1.msra.mxu0 %v920
      %922 = vmatprep.subr.mxu0 0.0
      %923 = vmatpush1.msra.mxu0 0.0
      %924 = vmatprep.subr.mxu0 0.0
      %925 = vmatpush1.msra.mxu0 0.0
      %926 = vmatprep.subr.mxu0 0.0
      %927 = vmatpush1.msra.mxu0 0.0
      %928 = vmatprep.subr.mxu0 0.0
      %929 = vmatpush1.msra.mxu0 0.0
      %930 = vmatprep.subr.mxu0 0.0
      %931 = vmatpush1.msra.mxu0 0.0
      %932 = vmatprep.subr.mxu0 0.0
      %933 = vmatpush1.msra.mxu0 0.0
      %934 = vmatprep.subr.mxu0 0.0
      %935 = vmatpush1.msra.mxu0 0.0
      %936 = vmatprep.subr.mxu0 0.0
      %937 = vmatpush1.msra.mxu0 0.0
      %938 = vmatprep.subr.mxu0 0.0
      %939 = vmatpush1.msra.mxu0 0.0
      %940 = vmatprep.subr.mxu0 0.0
      %941 = vmatpush1.msra.mxu0 0.0
      %942 = vmatprep.subr.mxu0 0.0
      %943 = vmatpush1.msra.mxu0 0.0
      %944 = vmatprep.subr.mxu0 0.0
      %945 = vmatpush1.msra.mxu0 0.0
      %946 = vmatprep.subr.mxu0 0.0
      %947 = vmatpush1.msra.mxu0 0.0
      %948 = vmatprep.subr.mxu0 0.0
      %949 = vmatpush1.msra.mxu0 0.0
      %950 = vmatprep.subr.mxu0 0.0
      %951 = vmatpush1.msra.mxu0 0.0
      %952 = vmatprep.subr.mxu0 0.0
      %953 = vmatpush1.msra.mxu0 0.0
      %954 = vmatprep.subr.mxu0 0.0
      %955 = vmatpush1.msra.mxu0 0.0
      %956 = vmatprep.subr.mxu0 0.0
      %957 = vmatpush1.msra.mxu0 0.0
      %958 = vmatprep.subr.mxu0 0.0
      %959 = vmatpush1.msra.mxu0 0.0
      %960 = vmatprep.subr.mxu0 0.0
      %961 = vmatpush1.msra.mxu0 0.0
      %962 = vmatprep.subr.mxu0 0.0
      %963 = vmatpush1.msra.mxu0 0.0
      %964 = vmatprep.subr.mxu0 0.0
      %965 = vmatpush1.msra.mxu0 0.0
      %966 = vmatprep.subr.mxu0 0.0
      %967 = vmatpush1.msra.mxu0 0.0
      %968 = vmatprep.subr.mxu0 0.0
      %969 = vmatpush1.msra.mxu0 0.0
      %970 = vmatprep.subr.mxu0 0.0
      %971 = vmatpush1.msra.mxu0 0.0
      %972 = vmatprep.subr.mxu0 0.0
      %973 = vmatpush1.msra.mxu0 0.0
      %974 = vmatprep.subr.mxu0 0.0
      %975 = vmatpush1.msra.mxu0 0.0
      %976 = vmatprep.subr.mxu0 0.0
      %977 = vmatpush1.msra.mxu0 0.0
      %978 = vmatprep.subr.mxu0 0.0
      %979 = vmatpush1.msra.mxu0 0.0
      %980 = vmatprep.subr.mxu0 0.0
      %981 = vmatpush1.msra.mxu0 0.0
      %982 = vmatprep.mubr.f32.mxu0 0.0
      %v983 = vand.u32 %v423, 4294901760
      %v984 = vsub.f32 %v423, %v983
      %v985 = vand.u32 %v984, 4294901760
      %v986 = vsub.f32 %v984, %v985
      %v987 = vand.u32 %v986, 4294901760
      %988 = vmatmul.mubr.f32.gmra.mrb[0].mxu0 %v987
      %v989 = vpop.f32.mrb[0].mxu0
      %v990 = vadd.f32 %v419, %v989
      %v991 = vpop.f32.mrb[0].mxu0
      %992 = vdwg.mxu0
      %993 = vmatprep.subr.mxu0 0.0
      %v994 = vand.u32 %v392, 4294901760
      %v995 = vsub.f32 %v392, %v994
      %v996 = vand.u32 %v995, 4294901760
      %v997 = vsub.f32 %v995, %v996
      %v998 = vand.u32 %v997, 4294901760
      %999 = vmatpush1.msra.mxu0 %v998
      %1000 = vmatprep.subr.mxu0 0.0
      %v1001 = vand.u32 %v413, 4294901760
      %v1002 = vsub.f32 %v413, %v1001
      %v1003 = vand.u32 %v1002, 4294901760
      %v1004 = vsub.f32 %v1002, %v1003
      %v1005 = vand.u32 %v1004, 4294901760
      %1006 = vmatpush1.msra.mxu0 %v1005
      %1007 = vmatprep.subr.mxu0 0.0
      %1008 = vmatpush1.msra.mxu0 0.0
      %1009 = vmatprep.subr.mxu0 0.0
      %1010 = vmatpush1.msra.mxu0 0.0
      %1011 = vmatprep.subr.mxu0 0.0
      %1012 = vmatpush1.msra.mxu0 0.0
      %1013 = vmatprep.subr.mxu0 0.0
      %1014 = vmatpush1.msra.mxu0 0.0
      %1015 = vmatprep.subr.mxu0 0.0
      %1016 = vmatpush1.msra.mxu0 0.0
      %1017 = vmatprep.subr.mxu0 0.0
      %1018 = vmatpush1.msra.mxu0 0.0
      %1019 = vmatprep.subr.mxu0 0.0
      %1020 = vmatpush1.msra.mxu0 0.0
      %1021 = vmatprep.subr.mxu0 0.0
      %1022 = vmatpush1.msra.mxu0 0.0
      %1023 = vmatprep.subr.mxu0 0.0
      %1024 = vmatpush1.msra.mxu0 0.0
      %1025 = vmatprep.subr.mxu0 0.0
      %1026 = vmatpush1.msra.mxu0 0.0
      %1027 = vmatprep.subr.mxu0 0.0
      %1028 = vmatpush1.msra.mxu0 0.0
      %1029 = vmatprep.subr.mxu0 0.0
      %1030 = vmatpush1.msra.mxu0 0.0
      %1031 = vmatprep.subr.mxu0 0.0
      %1032 = vmatpush1.msra.mxu0 0.0
      %1033 = vmatprep.subr.mxu0 0.0
      %1034 = vmatpush1.msra.mxu0 0.0
      %1035 = vmatprep.subr.mxu0 0.0
      %1036 = vmatpush1.msra.mxu0 0.0
      %1037 = vmatprep.subr.mxu0 0.0
      %1038 = vmatpush1.msra.mxu0 0.0
      %1039 = vmatprep.subr.mxu0 0.0
      %1040 = vmatpush1.msra.mxu0 0.0
      %1041 = vmatprep.subr.mxu0 0.0
      %1042 = vmatpush1.msra.mxu0 0.0
      %1043 = vmatprep.subr.mxu0 0.0
      %1044 = vmatpush1.msra.mxu0 0.0
      %1045 = vmatprep.subr.mxu0 0.0
      %1046 = vmatpush1.msra.mxu0 0.0
      %1047 = vmatprep.subr.mxu0 0.0
      %1048 = vmatpush1.msra.mxu0 0.0
      %1049 = vmatprep.subr.mxu0 0.0
      %1050 = vmatpush1.msra.mxu0 0.0
      %1051 = vmatprep.subr.mxu0 0.0
      %1052 = vmatpush1.msra.mxu0 0.0
      %1053 = vmatprep.subr.mxu0 0.0
      %1054 = vmatpush1.msra.mxu0 0.0
      %1055 = vmatprep.subr.mxu0 0.0
      %1056 = vmatpush1.msra.mxu0 0.0
      %1057 = vmatprep.subr.mxu0 0.0
      %1058 = vmatpush1.msra.mxu0 0.0
      %1059 = vmatprep.subr.mxu0 0.0
      %1060 = vmatpush1.msra.mxu0 0.0
      %1061 = vmatprep.subr.mxu0 0.0
      %1062 = vmatpush1.msra.mxu0 0.0
      %1063 = vmatprep.subr.mxu0 0.0
      %1064 = vmatpush1.msra.mxu0 0.0
      %1065 = vmatprep.subr.mxu0 0.0
      %1066 = vmatpush1.msra.mxu0 0.0
      %1067 = vmatprep.mubr.f32.mxu0 0.0
      %v1068 = vand.u32 %v423, 4294901760
      %1069 = vmatmul.mubr.f32.gmra.mrb[0].mxu0 %v1068
      %v1070 = vpop.f32.mrb[0].mxu0
      %v1071 = vadd.f32 %v990, %v1070
      %v1072 = vpop.f32.mrb[0].mxu0
      %1073 = vdwg.mxu0
      %1074 = vmatprep.subr.mxu0 0.0
      %v1075 = vand.u32 %v392, 4294901760
      %v1076 = vsub.f32 %v392, %v1075
      %1077 = vmatpush1.msra.mxu0 %v1076
      %1078 = vmatprep.subr.mxu0 0.0
      %v1079 = vand.u32 %v413, 4294901760
      %v1080 = vsub.f32 %v413, %v1079
      %1081 = vmatpush1.msra.mxu0 %v1080
      %1082 = vmatprep.subr.mxu0 0.0
      %1083 = vmatpush1.msra.mxu0 0.0
      %1084 = vmatprep.subr.mxu0 0.0
      %1085 = vmatpush1.msra.mxu0 0.0
      %1086 = vmatprep.subr.mxu0 0.0
      %1087 = vmatpush1.msra.mxu0 0.0
      %1088 = vmatprep.subr.mxu0 0.0
      %1089 = vmatpush1.msra.mxu0 0.0
      %1090 = vmatprep.subr.mxu0 0.0
      %1091 = vmatpush1.msra.mxu0 0.0
      %1092 = vmatprep.subr.mxu0 0.0
      %1093 = vmatpush1.msra.mxu0 0.0
      %1094 = vmatprep.subr.mxu0 0.0
      %1095 = vmatpush1.msra.mxu0 0.0
      %1096 = vmatprep.subr.mxu0 0.0
      %1097 = vmatpush1.msra.mxu0 0.0
      %1098 = vmatprep.subr.mxu0 0.0
      %1099 = vmatpush1.msra.mxu0 0.0
      %1100 = vmatprep.subr.mxu0 0.0
      %1101 = vmatpush1.msra.mxu0 0.0
      %1102 = vmatprep.subr.mxu0 0.0
      %1103 = vmatpush1.msra.mxu0 0.0
      %1104 = vmatprep.subr.mxu0 0.0
      %1105 = vmatpush1.msra.mxu0 0.0
      %1106 = vmatprep.subr.mxu0 0.0
      %1107 = vmatpush1.msra.mxu0 0.0
      %1108 = vmatprep.subr.mxu0 0.0
      %1109 = vmatpush1.msra.mxu0 0.0
      %1110 = vmatprep.subr.mxu0 0.0
      %1111 = vmatpush1.msra.mxu0 0.0
      %1112 = vmatprep.subr.mxu0 0.0
      %1113 = vmatpush1.msra.mxu0 0.0
      %1114 = vmatprep.subr.mxu0 0.0
      %1115 = vmatpush1.msra.mxu0 0.0
      %1116 = vmatprep.subr.mxu0 0.0
      %1117 = vmatpush1.msra.mxu0 0.0
      %1118 = vmatprep.subr.mxu0 0.0
      %1119 = vmatpush1.msra.mxu0 0.0
      %1120 = vmatprep.subr.mxu0 0.0
      %1121 = vmatpush1.msra.mxu0 0.0
      %1122 = vmatprep.subr.mxu0 0.0
      %1123 = vmatpush1.msra.mxu0 0.0
      %1124 = vmatprep.subr.mxu0 0.0
      %1125 = vmatpush1.msra.mxu0 0.0
      %1126 = vmatprep.subr.mxu0 0.0
      %1127 = vmatpush1.msra.mxu0 0.0
      %1128 = vmatprep.subr.mxu0 0.0
      %1129 = vmatpush1.msra.mxu0 0.0
      %1130 = vmatprep.subr.mxu0 0.0
      %1131 = vmatpush1.msra.mxu0 0.0
      %1132 = vmatprep.subr.mxu0 0.0
      %1133 = vmatpush1.msra.mxu0 0.0
      %1134 = vmatprep.subr.mxu0 0.0
      %1135 = vmatpush1.msra.mxu0 0.0
      %1136 = vmatprep.subr.mxu0 0.0
      %1137 = vmatpush1.msra.mxu0 0.0
      %1138 = vmatprep.subr.mxu0 0.0
      %1139 = vmatpush1.msra.mxu0 0.0
      %1140 = vmatprep.subr.mxu0 0.0
      %1141 = vmatpush1.msra.mxu0 0.0
      %1142 = vmatprep.mubr.f32.mxu0 0.0
      %v1143 = vand.u32 %v423, 4294901760
      %v1144 = vsub.f32 %v423, %v1143
      %1145 = vmatmul.mubr.f32.gmra.mrb[0].mxu0 %v1144
      %v1146 = vpop.f32.mrb[0].mxu0
      %v1147 = vadd.f32 %v1071, %v1146
      %v1148 = vpop.f32.mrb[0].mxu0
      %1149 = vdwg.mxu0
      %1150 = vmatprep.subr.mxu0 0.0
      %v1151 = vand.u32 %v392, 4294901760
      %1152 = vmatpush1.msra.mxu0 %v1151
      %1153 = vmatprep.subr.mxu0 0.0
      %v1154 = vand.u32 %v413, 4294901760
      %1155 = vmatpush1.msra.mxu0 %v1154
      %1156 = vmatprep.subr.mxu0 0.0
      %1157 = vmatpush1.msra.mxu0 0.0
      %1158 = vmatprep.subr.mxu0 0.0
      %1159 = vmatpush1.msra.mxu0 0.0
      %1160 = vmatprep.subr.mxu0 0.0
      %1161 = vmatpush1.msra.mxu0 0.0
      %1162 = vmatprep.subr.mxu0 0.0
      %1163 = vmatpush1.msra.mxu0 0.0
      %1164 = vmatprep.subr.mxu0 0.0
      %1165 = vmatpush1.msra.mxu0 0.0
      %1166 = vmatprep.subr.mxu0 0.0
      %1167 = vmatpush1.msra.mxu0 0.0
      %1168 = vmatprep.subr.mxu0 0.0
      %1169 = vmatpush1.msra.mxu0 0.0
      %1170 = vmatprep.subr.mxu0 0.0
      %1171 = vmatpush1.msra.mxu0 0.0
      %1172 = vmatprep.subr.mxu0 0.0
      %1173 = vmatpush1.msra.mxu0 0.0
      %1174 = vmatprep.subr.mxu0 0.0
      %1175 = vmatpush1.msra.mxu0 0.0
      %1176 = vmatprep.subr.mxu0 0.0
      %1177 = vmatpush1.msra.mxu0 0.0
      %1178 = vmatprep.subr.mxu0 0.0
      %1179 = vmatpush1.msra.mxu0 0.0
      %1180 = vmatprep.subr.mxu0 0.0
      %1181 = vmatpush1.msra.mxu0 0.0
      %1182 = vmatprep.subr.mxu0 0.0
      %1183 = vmatpush1.msra.mxu0 0.0
      %1184 = vmatprep.subr.mxu0 0.0
      %1185 = vmatpush1.msra.mxu0 0.0
      %1186 = vmatprep.subr.mxu0 0.0
      %1187 = vmatpush1.msra.mxu0 0.0
      %1188 = vmatprep.subr.mxu0 0.0
      %1189 = vmatpush1.msra.mxu0 0.0
      %1190 = vmatprep.subr.mxu0 0.0
      %1191 = vmatpush1.msra.mxu0 0.0
      %1192 = vmatprep.subr.mxu0 0.0
      %1193 = vmatpush1.msra.mxu0 0.0
      %1194 = vmatprep.subr.mxu0 0.0
      %1195 = vmatpush1.msra.mxu0 0.0
      %1196 = vmatprep.subr.mxu0 0.0
      %1197 = vmatpush1.msra.mxu0 0.0
      %1198 = vmatprep.subr.mxu0 0.0
      %1199 = vmatpush1.msra.mxu0 0.0
      %1200 = vmatprep.subr.mxu0 0.0
      %1201 = vmatpush1.msra.mxu0 0.0
      %1202 = vmatprep.subr.mxu0 0.0
      %1203 = vmatpush1.msra.mxu0 0.0
      %1204 = vmatprep.subr.mxu0 0.0
      %1205 = vmatpush1.msra.mxu0 0.0
      %1206 = vmatprep.subr.mxu0 0.0
      %1207 = vmatpush1.msra.mxu0 0.0
      %1208 = vmatprep.subr.mxu0 0.0
      %1209 = vmatpush1.msra.mxu0 0.0
      %1210 = vmatprep.subr.mxu0 0.0
      %1211 = vmatpush1.msra.mxu0 0.0
      %1212 = vmatprep.subr.mxu0 0.0
      %1213 = vmatpush1.msra.mxu0 0.0
      %1214 = vmatprep.subr.mxu0 0.0
      %1215 = vmatpush1.msra.mxu0 0.0
      %1216 = vmatprep.mubr.f32.mxu0 0.0
      %v1217 = vand.u32 %v423, 4294901760
      %v1218 = vsub.f32 %v423, %v1217
      %v1219 = vand.u32 %v1218, 4294901760
      %1220 = vmatmul.mubr.f32.gmra.mrb[0].mxu0 %v1219
      %v1221 = vpop.f32.mrb[0].mxu0
      %v1222 = vadd.f32 %v1147, %v1221
      %v1223 = vpop.f32.mrb[0].mxu0
      %1224 = vdwg.mxu0
      %1225 = vmatprep.subr.mxu0 0.0
      %v1226 = vand.u32 %v392, 4294901760
      %v1227 = vsub.f32 %v392, %v1226
      %v1228 = vand.u32 %v1227, 4294901760
      %1229 = vmatpush1.msra.mxu0 %v1228
      %1230 = vmatprep.subr.mxu0 0.0
      %v1231 = vand.u32 %v413, 4294901760
      %v1232 = vsub.f32 %v413, %v1231
      %v1233 = vand.u32 %v1232, 4294901760
      %1234 = vmatpush1.msra.mxu0 %v1233
      %1235 = vmatprep.subr.mxu0 0.0
      %1236 = vmatpush1.msra.mxu0 0.0
      %1237 = vmatprep.subr.mxu0 0.0
      %1238 = vmatpush1.msra.mxu0 0.0
      %1239 = vmatprep.subr.mxu0 0.0
      %1240 = vmatpush1.msra.mxu0 0.0
      %1241 = vmatprep.subr.mxu0 0.0
      %1242 = vmatpush1.msra.mxu0 0.0
      %1243 = vmatprep.subr.mxu0 0.0
      %1244 = vmatpush1.msra.mxu0 0.0
      %1245 = vmatprep.subr.mxu0 0.0
      %1246 = vmatpush1.msra.mxu0 0.0
      %1247 = vmatprep.subr.mxu0 0.0
      %1248 = vmatpush1.msra.mxu0 0.0
      %1249 = vmatprep.subr.mxu0 0.0
      %1250 = vmatpush1.msra.mxu0 0.0
      %1251 = vmatprep.subr.mxu0 0.0
      %1252 = vmatpush1.msra.mxu0 0.0
      %1253 = vmatprep.subr.mxu0 0.0
      %1254 = vmatpush1.msra.mxu0 0.0
      %1255 = vmatprep.subr.mxu0 0.0
      %1256 = vmatpush1.msra.mxu0 0.0
      %1257 = vmatprep.subr.mxu0 0.0
      %1258 = vmatpush1.msra.mxu0 0.0
      %1259 = vmatprep.subr.mxu0 0.0
      %1260 = vmatpush1.msra.mxu0 0.0
      %1261 = vmatprep.subr.mxu0 0.0
      %1262 = vmatpush1.msra.mxu0 0.0
      %1263 = vmatprep.subr.mxu0 0.0
      %1264 = vmatpush1.msra.mxu0 0.0
      %1265 = vmatprep.subr.mxu0 0.0
      %1266 = vmatpush1.msra.mxu0 0.0
      %1267 = vmatprep.subr.mxu0 0.0
      %1268 = vmatpush1.msra.mxu0 0.0
      %1269 = vmatprep.subr.mxu0 0.0
      %1270 = vmatpush1.msra.mxu0 0.0
      %1271 = vmatprep.subr.mxu0 0.0
      %1272 = vmatpush1.msra.mxu0 0.0
      %1273 = vmatprep.subr.mxu0 0.0
      %1274 = vmatpush1.msra.mxu0 0.0
      %1275 = vmatprep.subr.mxu0 0.0
      %1276 = vmatpush1.msra.mxu0 0.0
      %1277 = vmatprep.subr.mxu0 0.0
      %1278 = vmatpush1.msra.mxu0 0.0
      %1279 = vmatprep.subr.mxu0 0.0
      %1280 = vmatpush1.msra.mxu0 0.0
      %1281 = vmatprep.subr.mxu0 0.0
      %1282 = vmatpush1.msra.mxu0 0.0
      %1283 = vmatprep.subr.mxu0 0.0
      %1284 = vmatpush1.msra.mxu0 0.0
      %1285 = vmatprep.subr.mxu0 0.0
      %1286 = vmatpush1.msra.mxu0 0.0
      %1287 = vmatprep.subr.mxu0 0.0
      %1288 = vmatpush1.msra.mxu0 0.0
      %1289 = vmatprep.subr.mxu0 0.0
      %1290 = vmatpush1.msra.mxu0 0.0
      %1291 = vmatprep.subr.mxu0 0.0
      %1292 = vmatpush1.msra.mxu0 0.0
      %1293 = vmatprep.subr.mxu0 0.0
      %1294 = vmatpush1.msra.mxu0 0.0
      %1295 = vmatprep.mubr.f32.mxu0 0.0
      %v1296 = vand.u32 %v423, 4294901760
      %1297 = vmatmul.mubr.f32.gmra.mrb[0].mxu0 %v1296
      %v1298 = vpop.f32.mrb[0].mxu0
      %v1299 = vadd.f32 %v1222, %v1298
      %v1300 = vpop.f32.mrb[0].mxu0
      %1301 = vdwg.mxu0
      %1302 = vmatprep.subr.mxu0 0.0
      %v1303 = vand.u32 %v392, 4294901760
      %1304 = vmatpush1.msra.mxu0 %v1303
      %1305 = vmatprep.subr.mxu0 0.0
      %v1306 = vand.u32 %v413, 4294901760
      %1307 = vmatpush1.msra.mxu0 %v1306
      %1308 = vmatprep.subr.mxu0 0.0
      %1309 = vmatpush1.msra.mxu0 0.0
      %1310 = vmatprep.subr.mxu0 0.0
      %1311 = vmatpush1.msra.mxu0 0.0
      %1312 = vmatprep.subr.mxu0 0.0
      %1313 = vmatpush1.msra.mxu0 0.0
      %1314 = vmatprep.subr.mxu0 0.0
      %1315 = vmatpush1.msra.mxu0 0.0
      %1316 = vmatprep.subr.mxu0 0.0
      %1317 = vmatpush1.msra.mxu0 0.0
      %1318 = vmatprep.subr.mxu0 0.0
      %1319 = vmatpush1.msra.mxu0 0.0
      %1320 = vmatprep.subr.mxu0 0.0
      %1321 = vmatpush1.msra.mxu0 0.0
      %1322 = vmatprep.subr.mxu0 0.0
      %1323 = vmatpush1.msra.mxu0 0.0
      %1324 = vmatprep.subr.mxu0 0.0
      %1325 = vmatpush1.msra.mxu0 0.0
      %1326 = vmatprep.subr.mxu0 0.0
      %1327 = vmatpush1.msra.mxu0 0.0
      %1328 = vmatprep.subr.mxu0 0.0
      %1329 = vmatpush1.msra.mxu0 0.0
      %1330 = vmatprep.subr.mxu0 0.0
      %1331 = vmatpush1.msra.mxu0 0.0
      %1332 = vmatprep.subr.mxu0 0.0
      %1333 = vmatpush1.msra.mxu0 0.0
      %1334 = vmatprep.subr.mxu0 0.0
      %1335 = vmatpush1.msra.mxu0 0.0
      %1336 = vmatprep.subr.mxu0 0.0
      %1337 = vmatpush1.msra.mxu0 0.0
      %1338 = vmatprep.subr.mxu0 0.0
      %1339 = vmatpush1.msra.mxu0 0.0
      %1340 = vmatprep.subr.mxu0 0.0
      %1341 = vmatpush1.msra.mxu0 0.0
      %1342 = vmatprep.subr.mxu0 0.0
      %1343 = vmatpush1.msra.mxu0 0.0
      %1344 = vmatprep.subr.mxu0 0.0
      %1345 = vmatpush1.msra.mxu0 0.0
      %1346 = vmatprep.subr.mxu0 0.0
      %1347 = vmatpush1.msra.mxu0 0.0
      %1348 = vmatprep.subr.mxu0 0.0
      %1349 = vmatpush1.msra.mxu0 0.0
      %1350 = vmatprep.subr.mxu0 0.0
      %1351 = vmatpush1.msra.mxu0 0.0
      %1352 = vmatprep.subr.mxu0 0.0
      %1353 = vmatpush1.msra.mxu0 0.0
      %1354 = vmatprep.subr.mxu0 0.0
      %1355 = vmatpush1.msra.mxu0 0.0
      %1356 = vmatprep.subr.mxu0 0.0
      %1357 = vmatpush1.msra.mxu0 0.0
      %1358 = vmatprep.subr.mxu0 0.0
      %1359 = vmatpush1.msra.mxu0 0.0
      %1360 = vmatprep.subr.mxu0 0.0
      %1361 = vmatpush1.msra.mxu0 0.0
      %1362 = vmatprep.subr.mxu0 0.0
      %1363 = vmatpush1.msra.mxu0 0.0
      %1364 = vmatprep.subr.mxu0 0.0
      %1365 = vmatpush1.msra.mxu0 0.0
      %1366 = vmatprep.subr.mxu0 0.0
      %1367 = vmatpush1.msra.mxu0 0.0
      %1368 = vmatprep.mubr.f32.mxu0 0.0
      %v1369 = vand.u32 %v423, 4294901760
      %1370 = vmatmul.mubr.f32.gmra.mrb[0].mxu0 %v1369
      %v1371 = vpop.f32.mrb[0].mxu0
      %v1372 = vadd.f32 %v1299, %v1371
      %v1373 = vpop.f32.mrb[0].mxu0
      %1374 = vdwg.mxu0
      %v1375 = vmax.f32 %v912, 1.3862944
      %v1376 = vmax.f32 %v914, 1.3862944
      %v1377 = vmax.f32 %v1372, 1.3862944
      %v1378 = vmin.f32 %v1375, 1.4142135
      %v1379 = vmin.f32 %v1376, 1.4142135
      %v1380 = vmin.f32 %v1377, 1.4142135
      %1381 = vst [vmem:[%s167] sm:$0xff] %v1378
      %1382 = vst [vmem:[%s167 + $0x8] sm:$0xff] %v1379
      %vm1383 = vcmask 113664
      %1384 = vst.msk [vmem:[%s167 + $0x10] sm:$0xff] %vm1383, %v1380
      %p1385 = scmp.lt.s32.totalorder %s14, 1
      %s1386 = scalar_select %p1385, %s14, 1
      %s1387 = smul.addr %s1386, 3
      %s1388 = smul.addr %s1387, 8
      %s1389 = scalar_lea.vmem %s3, %s1388
      // Predicated region
      $region33: #{conv_transpose_clamp.1} parent=31 // pred_check
        %p1390 = pneg %p100
      $region34: #{conv_transpose_clamp.1} parent=31 // pred_check_branch
        %1392 = sbr.rel (%p1390) target = $region36
      $region35: #{conv_transpose_clamp.1} parent=31 // pred_region
        _
      $region36: #{conv_transpose_clamp.1} parent=31 // pred_fallthru
        _
    $region32: #{conv_transpose_clamp.1} parent=5 // pred_fallthru
      _
    %p1393 = scmp.le.s32.totalorder 2, %s9
    // Predicated region
    $region37: #{conv_transpose_clamp.1} parent=5 // pred_check
      %p1394 = pneg %p1393
    $region38: #{conv_transpose_clamp.1} parent=5 // pred_check_branch
      %1396 = sbr.rel (%p1394) target = $region40
    $region39: #{conv_transpose_clamp.1} parent=5 // pred_region
      %s1397 = ssub.s32 %s9, 2
      // Predicated region
      $region41: #{conv_transpose_clamp.1} parent=39 // pred_check
        %p1398 = pneg %p106
      $region42: #{conv_transpose_clamp.1} parent=39 // pred_check_branch
        %1400 = sbr.rel (%p1398) target = $region44
      $region43: #{conv_transpose_clamp.1} parent=39 // pred_region
        %p1401 = scmp.lt.s32.totalorder %s15, 1
        %s1402 = scalar_select %p1401, %s15, 1
        %s1403 = smul.addr %s1402, 3
        %s1404 = smul.addr %s1403, 8
        %s1405 = scalar_lea.vmem %s3, %s1404
      $region44: #{conv_transpose_clamp.1} parent=39 // pred_fallthru
        _
    $region40: #{conv_transpose_clamp.1} parent=5 // pred_fallthru
      _
  $region6: #{conv_transpose_clamp.1} parent=0 // loop_footer
    %s13 = sadd.s32 1, %s9
  $region7: #{conv_transpose_clamp.1} parent=0 // loop_footer_branch
    %8 = sbr.rel target = $region3
  $region8: #{conv_transpose_clamp.1} parent=0 // loop_exit
    _

</llo_original>
